<compile_context>
chip_gen: v5e
topology: v5e:2x2
jax: 0.10.0
libtpu: 0.0.40
codegen_flags: <defaults>
</compile_context>

<pallas_src>
import jax
import jax.numpy as jnp
from jax.experimental import pallas as pl
from jax.experimental.pallas import tpu as pltpu


# ---------------------------------------------------------------------------
# Kernel
# ---------------------------------------------------------------------------
def _residual_kernel(x_ref, w1_ref, s1_ref, t1_ref, w2_ref, s2_ref, t2_ref, o_ref):
    """One batch block per grid step, everything lane-dense.

    x_ref     : (nb, H, W*C)  f32   input rows; lane l = w*C + c
    w1/w2_ref : (3, W*C, W*C) bf16  banded conv weights, index = dy tap
    s*/t*_ref : (1, W*C)      f32   folded (conv-bias + eval BN) scale / shift,
                                    tiled so lane l holds the value for channel l%C
    o_ref     : (nb, H, W*C)  f32
    """
    nb, H, WC = o_ref.shape
    R = nb * H

    # Per-image vertical boundary masks: row h==0 has no row above, row h==H-1 has
    # no row below.  0/1 f32 columns, lane-broadcast at the multiply (VPU work
    # hidden under the MXU), computed once for both convs.
    h_idx = jax.lax.broadcasted_iota(jnp.int32, (R, 1), 0) % H
    not_top = (h_idx != 0).astype(jnp.float32)
    not_bot = (h_idx != (H - 1)).astype(jnp.float32)

    def conv3x3(z, w_ref):
        """3x3 'same' conv of lane-dense rows z:(R, W*C) f32 -> (R, W*C) f32.

        out = roll_down(z @ W0) * not_top + (z @ W1) + roll_up(z @ W2) * not_bot
        where W_dy is the banded (W*C, W*C) matrix holding the dx taps + channel
        contraction for tap dy; the XLU sublane rolls do the +/-1 row shift and
        the masks zero the per-image top/bottom halo rows (no cross-image leak).
        """
        zb = z.astype(jnp.bfloat16)                        # single cast per conv
        acc = pltpu.roll(
            jnp.dot(zb, w_ref[0], preferred_element_type=jnp.float32),
            shift=1, axis=0) * not_top                     # contribution of row h-1
        acc = acc + jnp.dot(zb, w_ref[1], preferred_element_type=jnp.float32)
        acc = acc + pltpu.roll(
            jnp.dot(zb, w_ref[2], preferred_element_type=jnp.float32),
            shift=R - 1, axis=0) * not_bot                 # contribution of row h+1
        return acc

    # conv1 -> folded (bias + eval BN1) -> swish
    y = conv3x3(x_ref[...].reshape(R, WC), w1_ref)
    y = y * s1_ref[...] + t1_ref[...]
    y = y * jax.nn.sigmoid(y)                              # swish(x) = x*sigmoid(x)

    # conv2 -> folded (bias + eval BN2) -> residual add.  x is re-loaded from VMEM
    # here (a few vld bundles, hidden under the MXU) instead of being held in
    # vregs across both convs.
    out = conv3x3(y, w2_ref)
    out = out * s2_ref[...] + t2_ref[...] + x_ref[...].reshape(R, WC)

    o_ref[...] = out.reshape(nb, H, WC).astype(o_ref.dtype)


# ---------------------------------------------------------------------------
# Wrapper-side (plain JAX) parameter preprocessing
# ---------------------------------------------------------------------------
def _fold_bn(gamma, beta, mean, var, conv_bias, eps):
    """Fold eval-mode BatchNorm2d + conv bias into per-channel scale/shift."""
    scale = gamma / jnp.sqrt(var + eps)
    shift = beta + scale * (conv_bias - mean)
    return scale.astype(jnp.float32), shift.astype(jnp.float32)


def _banded_conv_weights(w_hwio, W):
    """(3, 3, Cin, Cout) HWIO -> (3, W*Cin, W*Cout) bf16 banded row-matmul weights.

    M_dy[w'*Cin + ci, w*Cout + co] = K[dy, w' - w + 1, ci, co]  if |w - w'| <= 1 else 0
    so that  out_row[h] = sum_dy rows[h + dy - 1] @ M_dy  reproduces the padded conv
    (the band structure also supplies the zero W-borders).
    """
    KH, KW, Cin, Cout = w_hwio.shape
    wp = jnp.arange(W)[:, None]            # input column w'  (rows of M)
    wo = jnp.arange(W)[None, :]            # output column w  (cols of M)
    dx = wp - wo + 1                       # kernel tap index
    valid = (dx >= 0) & (dx < KW)
    dx_c = jnp.clip(dx, 0, KW - 1)
    mats = []
    for dy in range(KH):
        blk = w_hwio[dy][dx_c]             # (W, W, Cin, Cout)
        blk = jnp.where(valid[:, :, None, None], blk, 0.0)
        mats.append(jnp.transpose(blk, (0, 2, 1, 3)).reshape(W * Cin, W * Cout))
    return jnp.stack(mats, axis=0).astype(jnp.bfloat16)


def _vmem_limit_bytes():
    """Generation-aware VMEM cap (~half of physical: 64 MiB on v5e/v6e, 32 MiB on
    v7x), with a conservative fallback if the trace-time query is unavailable."""
    try:
        cap = int(pltpu.get_tpu_info().vmem_capacity_bytes)
        return min(max(cap // 2, 32 * 1024 * 1024), 100 * 1024 * 1024)
    except Exception:
        return 48 * 1024 * 1024


def _pick_nb(N, H, WC, vmem_budget_bytes):
    """Largest batch block that (a) divides N, (b) leaves >= 2 grid steps when
    N >= 2 (so both v7x TensorCores get work; the extra step is negligible on the
    single-TC v5e/v6e), and (c) keeps the double-buffered f32 in+out blocks under
    the VMEM budget."""
    for cand in range(N, 0, -1):
        if N % cand:
            continue
        if N >= 2 and N // cand < 2:
            continue
        if 4 * cand * H * WC * 4 > vmem_budget_bytes:   # 2 bufs x (in + out) x f32
            continue
        return cand
    return 1


# ---------------------------------------------------------------------------
# Public forward (NCHW in / NCHW out, matching the PyTorch module)
# ---------------------------------------------------------------------------
@jax.jit
def residual_forward(x_nchw, w1, b1, g1, be1, m1, v1, w2, b2, g2, be2, m2, v2):
    eps = 1e-5
    N, C, H, W = x_nchw.shape
    WC = W * C

    # NCHW -> lane-dense rows (N, H, W*C); lane l = w*C + c (channels fastest).
    # (On v5e, bf16 rows + bf16 output would halve the exposed HBM traffic, at the
    #  cost of a bf16 residual add -- kept f32 here for accuracy.)
    x_rows = jnp.transpose(x_nchw, (0, 2, 3, 1)).reshape(N, H, WC).astype(jnp.float32)

    # Fold conv bias + eval-mode BN into per-channel scale/shift, tiled per lane.
    s1, t1 = _fold_bn(g1, be1, m1, v1, b1, eps)
    s2, t2 = _fold_bn(g2, be2, m2, v2, b2, eps)
    s1 = jnp.tile(s1, W).reshape(1, WC)
    t1 = jnp.tile(t1, W).reshape(1, WC)
    s2 = jnp.tile(s2, W).reshape(1, WC)
    t2 = jnp.tile(t2, W).reshape(1, WC)

    # Banded MXU weights (bf16).
    w1b = _banded_conv_weights(w1, W)
    w2b = _banded_conv_weights(w2, W)

    vmem_limit = _vmem_limit_bytes()
    # Leave room for the resident banded weights + scale/shift rows + headroom.
    weights_bytes = 2 * 3 * WC * WC * 2 + 4 * WC * 4
    nb = _pick_nb(
        N, H, WC,
        max(vmem_limit - weights_bytes - 8 * 1024 * 1024, 4 * 1024 * 1024))

    out_rows = pl.pallas_call(
        _residual_kernel,
        out_shape=jax.ShapeDtypeStruct((N, H, WC), jnp.float32),
        grid_spec=pltpu.PrefetchScalarGridSpec(
            num_scalar_prefetch=0,
            grid=(N // nb,),
            in_specs=[
                pl.BlockSpec((nb, H, WC), lambda b: (b, 0, 0)),     # x rows
                pl.BlockSpec((3, WC, WC), lambda b: (0, 0, 0)),     # conv1 banded W
                pl.BlockSpec((1, WC), lambda b: (0, 0)),            # s1
                pl.BlockSpec((1, WC), lambda b: (0, 0)),            # t1
                pl.BlockSpec((3, WC, WC), lambda b: (0, 0, 0)),     # conv2 banded W
                pl.BlockSpec((1, WC), lambda b: (0, 0)),            # s2
                pl.BlockSpec((1, WC), lambda b: (0, 0)),            # t2
            ],
            out_specs=pl.BlockSpec((nb, H, WC), lambda b: (b, 0, 0)),
        ),
        compiler_params=pltpu.CompilerParams(
            dimension_semantics=("parallel",),
            vmem_limit_bytes=vmem_limit,
        ),
    )(x_rows, w1b, s1, t1, w2b, s2, t2)

    # lane-dense rows -> NCHW
    return jnp.transpose(out_rows.reshape(N, H, W, C), (0, 3, 1, 2))


# ---------------------------------------------------------------------------
# Pure-JAX reference (f32, HIGHEST precision) for a correctness check
# ---------------------------------------------------------------------------
def _reference_forward(x, w1, b1, g1, be1, m1, v1, w2, b2, g2, be2, m2, v2, eps=1e-5):
    xh = jnp.transpose(x, (0, 2, 3, 1))
    dims = ('NHWC', 'HWIO', 'NHWC')

    def conv(z, w, b):
        return jax.lax.conv_general_dilated(
            z, w, (1, 1), ((1, 1), (1, 1)), dimension_numbers=dims,
            precision=jax.lax.Precision.HIGHEST) + b

    def bn(z, g, be, m, v):
        return (z - m) * (g / jnp.sqrt(v + eps)) + be

    y = bn(conv(xh, w1, b1), g1, be1, m1, v1)
    y = y * jax.nn.sigmoid(y)
    z = bn(conv(y, w2, b2), g2, be2, m2, v2) + xh
    return jnp.transpose(z, (0, 3, 1, 2))


if __name__ == "__main__":
    # Small shapes consistent with the module (residual requires in_channels == n).
    # W*C = 128 -> one full lane row per image row.
    N, C, H, W = 2, 8, 16, 16
    key = jax.random.PRNGKey(0)
    ks = jax.random.split(key, 13)

    x = jax.random.normal(ks[0], (N, C, H, W), jnp.float32)

    # Conv weights directly in HWIO (kH, kW, Cin, Cout); a PyTorch OIHW weight maps
    # via w.transpose(2, 3, 1, 0). Biases are per output channel.
    w1 = jax.random.normal(ks[1], (3, 3, C, C), jnp.float32) * 0.1
    b1 = jax.random.normal(ks[2], (C,), jnp.float32) * 0.1
    w2 = jax.random.normal(ks[3], (3, 3, C, C), jnp.float32) * 0.1
    b2 = jax.random.normal(ks[4], (C,), jnp.float32) * 0.1

    # BatchNorm2d params / running stats (eval-mode semantics).
    g1 = 1.0 + 0.1 * jax.random.normal(ks[5], (C,), jnp.float32)
    be1 = 0.1 * jax.random.normal(ks[6], (C,), jnp.float32)
    m1 = 0.1 * jax.random.normal(ks[7], (C,), jnp.float32)
    v1 = 0.5 + jax.random.uniform(ks[8], (C,), jnp.float32)
    g2 = 1.0 + 0.1 * jax.random.normal(ks[9], (C,), jnp.float32)
    be2 = 0.1 * jax.random.normal(ks[10], (C,), jnp.float32)
    m2 = 0.1 * jax.random.normal(ks[11], (C,), jnp.float32)
    v2 = 0.5 + jax.random.uniform(ks[12], (C,), jnp.float32)

    out = residual_forward(x, w1, b1, g1, be1, m1, v1, w2, b2, g2, be2, m2, v2)
    jax.block_until_ready(out)
    assert out.shape == (N, C, H, W)

    # Correctness check vs. f32 reference (loose tolerance: MXU operands are bf16).
    ref = _reference_forward(x, w1, b1, g1, be1, m1, v1, w2, b2, g2, be2, m2, v2)
    err = float(jnp.max(jnp.abs(out - ref)))
    assert err < 0.3, f"max abs err {err}"

    print("KERNEL_OK")
</pallas_src>

<mosaic_0001>
module attributes {stable_mosaic.version = 11 : i64} {
  func.func @_residual_kernel(%arg0: i32, %arg1: memref<1x16x128xf32, #tpu.memory_space<vmem>>, %arg2: memref<3x128x128xbf16, #tpu.memory_space<vmem>>, %arg3: memref<1x128xf32, #tpu.memory_space<vmem>>, %arg4: memref<1x128xf32, #tpu.memory_space<vmem>>, %arg5: memref<3x128x128xbf16, #tpu.memory_space<vmem>>, %arg6: memref<1x128xf32, #tpu.memory_space<vmem>>, %arg7: memref<1x128xf32, #tpu.memory_space<vmem>>, %arg8: memref<1x16x128xf32, #tpu.memory_space<vmem>>) attributes {dimension_semantics = [#tpu.dimension_semantics<parallel>], iteration_bounds = array<i64: 2>, scalar_prefetch = 0 : i64, scratch_operands = 0 : i64, tpu.core_type = #tpu.core_type<tc>, window_params = [{transform_indices = @transform_0, window_bounds = array<i64: 1, 16, 128>}, {pipeline_mode = #tpu.pipeline_mode<synchronous>, transform_indices = @transform_1, window_bounds = array<i64: 3, 128, 128>}, {pipeline_mode = #tpu.pipeline_mode<synchronous>, transform_indices = @transform_2, window_bounds = array<i64: 1, 128>}, {pipeline_mode = #tpu.pipeline_mode<synchronous>, transform_indices = @transform_3, window_bounds = array<i64: 1, 128>}, {pipeline_mode = #tpu.pipeline_mode<synchronous>, transform_indices = @transform_4, window_bounds = array<i64: 3, 128, 128>}, {pipeline_mode = #tpu.pipeline_mode<synchronous>, transform_indices = @transform_5, window_bounds = array<i64: 1, 128>}, {pipeline_mode = #tpu.pipeline_mode<synchronous>, transform_indices = @transform_6, window_bounds = array<i64: 1, 128>}, {transform_indices = @transform_7, window_bounds = array<i64: 1, 16, 128>}]} {
    %0 = tpu.iota {dimensions = array<i32: 0>} : vector<16x1xi32>
    %c16_i32 = arith.constant 16 : i32
    %c0_i32 = arith.constant 0 : i32
    %1 = arith.cmpi eq, %c16_i32, %c0_i32 : i32
    %c1_i32 = arith.constant 1 : i32
    %2 = arith.select %1, %c1_i32, %c16_i32 : i32
    %3 = vector.broadcast %2 : i32 to vector<16x1xi32>
    %4 = arith.remsi %0, %3 : vector<16x1xi32>
    %c0_i32_0 = arith.constant 0 : i32
    %5 = vector.broadcast %c0_i32_0 : i32 to vector<16x1xi32>
    %6 = arith.cmpi ne, %4, %5 : vector<16x1xi32>
    %c0_i32_1 = arith.constant 0 : i32
    %7 = vector.broadcast %c0_i32_1 : i32 to vector<16x1xi32>
    %8 = arith.cmpi slt, %4, %7 : vector<16x1xi32>
    %c0_i32_2 = arith.constant 0 : i32
    %9 = arith.cmpi slt, %2, %c0_i32_2 : i32
    %10 = vector.broadcast %9 : i1 to vector<16x1xi1>
    %11 = vector.broadcast %10 : vector<16x1xi1> to vector<16x1xi1>
    %12 = arith.xori %8, %11 : vector<16x1xi1>
    %13 = arith.andi %12, %6 : vector<16x1xi1>
    %14 = vector.broadcast %2 : i32 to vector<16x1xi32>
    %15 = arith.addi %4, %14 : vector<16x1xi32>
    %16 = arith.select %13, %15, %4 : vector<16x1xi1>, vector<16x1xi32>
    %c0_i32_3 = arith.constant 0 : i32
    %17 = vector.broadcast %c0_i32_3 : i32 to vector<16x1xi32>
    %18 = arith.cmpi ne, %16, %17 : vector<16x1xi32>
    %19 = arith.extui %18 : vector<16x1xi1> to vector<16x1xi32>
    %20 = arith.sitofp %19 : vector<16x1xi32> to vector<16x1xf32>
    %c15_i32 = arith.constant 15 : i32
    %21 = vector.broadcast %c15_i32 : i32 to vector<16x1xi32>
    %22 = arith.cmpi ne, %16, %21 : vector<16x1xi32>
    %23 = arith.extui %22 : vector<16x1xi1> to vector<16x1xi32>
    %24 = arith.sitofp %23 : vector<16x1xi32> to vector<16x1xf32>
    %c0 = arith.constant 0 : index
    %c0_4 = arith.constant 0 : index
    %c0_5 = arith.constant 0 : index
    %25 = vector.load %arg1[%c0, %c0_4, %c0_5] : memref<1x16x128xf32, #tpu.memory_space<vmem>>, vector<1x16x128xf32>
    %26 = vector.shape_cast %25 : vector<1x16x128xf32> to vector<16x128xf32>
    %27 = arith.truncf %26 : vector<16x128xf32> to vector<16x128xbf16>
    %c0_6 = arith.constant 0 : index
    %c0_7 = arith.constant 0 : index
    %c0_8 = arith.constant 0 : index
    %28 = vector.load %arg2[%c0_6, %c0_7, %c0_8] : memref<3x128x128xbf16, #tpu.memory_space<vmem>>, vector<1x128x128xbf16>
    %29 = vector.shape_cast %28 : vector<1x128x128xbf16> to vector<128x128xbf16>
    %cst = arith.constant dense<0.000000e+00> : vector<16x128xf32>
    %30 = tpu.matmul %27, %29, %cst {dimension_numbers = #tpu.dot_dimension_numbers<[1], [0], [0], [1], [0, 0, 1, 1], [], []>} : vector<16x128xbf16>, vector<128x128xbf16>, vector<16x128xf32> -> vector<16x128xf32>
    %c1_i32_9 = arith.constant 1 : i32
    %31 = tpu.dynamic_rotate %30 by %c1_i32_9 dim 0 : vector<16x128xf32>, i32 -> vector<16x128xf32>
    %32 = vector.broadcast %20 : vector<16x1xf32> to vector<16x128xf32>
    %33 = arith.mulf %31, %32 : vector<16x128xf32>
    %c1 = arith.constant 1 : index
    %c0_10 = arith.constant 0 : index
    %c0_11 = arith.constant 0 : index
    %34 = vector.load %arg2[%c1, %c0_10, %c0_11] : memref<3x128x128xbf16, #tpu.memory_space<vmem>>, vector<1x128x128xbf16>
    %35 = vector.shape_cast %34 : vector<1x128x128xbf16> to vector<128x128xbf16>
    %cst_12 = arith.constant dense<0.000000e+00> : vector<16x128xf32>
    %36 = tpu.matmul %27, %35, %cst_12 {dimension_numbers = #tpu.dot_dimension_numbers<[1], [0], [0], [1], [0, 0, 1, 1], [], []>} : vector<16x128xbf16>, vector<128x128xbf16>, vector<16x128xf32> -> vector<16x128xf32>
    %37 = arith.addf %33, %36 : vector<16x128xf32>
    %c2 = arith.constant 2 : index
    %c0_13 = arith.constant 0 : index
    %c0_14 = arith.constant 0 : index
    %38 = vector.load %arg2[%c2, %c0_13, %c0_14] : memref<3x128x128xbf16, #tpu.memory_space<vmem>>, vector<1x128x128xbf16>
    %39 = vector.shape_cast %38 : vector<1x128x128xbf16> to vector<128x128xbf16>
    %cst_15 = arith.constant dense<0.000000e+00> : vector<16x128xf32>
    %40 = tpu.matmul %27, %39, %cst_15 {dimension_numbers = #tpu.dot_dimension_numbers<[1], [0], [0], [1], [0, 0, 1, 1], [], []>} : vector<16x128xbf16>, vector<128x128xbf16>, vector<16x128xf32> -> vector<16x128xf32>
    %c15_i32_16 = arith.constant 15 : i32
    %41 = tpu.dynamic_rotate %40 by %c15_i32_16 dim 0 : vector<16x128xf32>, i32 -> vector<16x128xf32>
    %42 = vector.broadcast %24 : vector<16x1xf32> to vector<16x128xf32>
    %43 = arith.mulf %41, %42 : vector<16x128xf32>
    %44 = arith.addf %37, %43 : vector<16x128xf32>
    %c0_17 = arith.constant 0 : index
    %c0_18 = arith.constant 0 : index
    %45 = vector.load %arg3[%c0_17, %c0_18] : memref<1x128xf32, #tpu.memory_space<vmem>>, vector<1x128xf32>
    %46 = vector.broadcast %45 : vector<1x128xf32> to vector<16x128xf32>
    %47 = arith.mulf %44, %46 : vector<16x128xf32>
    %c0_19 = arith.constant 0 : index
    %c0_20 = arith.constant 0 : index
    %48 = vector.load %arg4[%c0_19, %c0_20] : memref<1x128xf32, #tpu.memory_space<vmem>>, vector<1x128xf32>
    %49 = vector.broadcast %48 : vector<1x128xf32> to vector<16x128xf32>
    %50 = arith.addf %47, %49 : vector<16x128xf32>
    %51 = arith.negf %50 : vector<16x128xf32>
    %52 = math.exp %51 : vector<16x128xf32>
    %cst_21 = arith.constant 1.000000e+00 : f32
    %53 = vector.broadcast %cst_21 : f32 to vector<16x128xf32>
    %54 = arith.addf %53, %52 : vector<16x128xf32>
    %55 = arith.divf %53, %54 : vector<16x128xf32>
    %56 = arith.mulf %50, %55 : vector<16x128xf32>
    %57 = arith.truncf %56 : vector<16x128xf32> to vector<16x128xbf16>
    %c0_22 = arith.constant 0 : index
    %c0_23 = arith.constant 0 : index
    %c0_24 = arith.constant 0 : index
    %58 = vector.load %arg5[%c0_22, %c0_23, %c0_24] : memref<3x128x128xbf16, #tpu.memory_space<vmem>>, vector<1x128x128xbf16>
    %59 = vector.shape_cast %58 : vector<1x128x128xbf16> to vector<128x128xbf16>
    %cst_25 = arith.constant dense<0.000000e+00> : vector<16x128xf32>
    %60 = tpu.matmul %57, %59, %cst_25 {dimension_numbers = #tpu.dot_dimension_numbers<[1], [0], [0], [1], [0, 0, 1, 1], [], []>} : vector<16x128xbf16>, vector<128x128xbf16>, vector<16x128xf32> -> vector<16x128xf32>
    %c1_i32_26 = arith.constant 1 : i32
    %61 = tpu.dynamic_rotate %60 by %c1_i32_26 dim 0 : vector<16x128xf32>, i32 -> vector<16x128xf32>
    %62 = vector.broadcast %20 : vector<16x1xf32> to vector<16x128xf32>
    %63 = arith.mulf %61, %62 : vector<16x128xf32>
    %c1_27 = arith.constant 1 : index
    %c0_28 = arith.constant 0 : index
    %c0_29 = arith.constant 0 : index
    %64 = vector.load %arg5[%c1_27, %c0_28, %c0_29] : memref<3x128x128xbf16, #tpu.memory_space<vmem>>, vector<1x128x128xbf16>
    %65 = vector.shape_cast %64 : vector<1x128x128xbf16> to vector<128x128xbf16>
    %cst_30 = arith.constant dense<0.000000e+00> : vector<16x128xf32>
    %66 = tpu.matmul %57, %65, %cst_30 {dimension_numbers = #tpu.dot_dimension_numbers<[1], [0], [0], [1], [0, 0, 1, 1], [], []>} : vector<16x128xbf16>, vector<128x128xbf16>, vector<16x128xf32> -> vector<16x128xf32>
    %67 = arith.addf %63, %66 : vector<16x128xf32>
    %c2_31 = arith.constant 2 : index
    %c0_32 = arith.constant 0 : index
    %c0_33 = arith.constant 0 : index
    %68 = vector.load %arg5[%c2_31, %c0_32, %c0_33] : memref<3x128x128xbf16, #tpu.memory_space<vmem>>, vector<1x128x128xbf16>
    %69 = vector.shape_cast %68 : vector<1x128x128xbf16> to vector<128x128xbf16>
    %cst_34 = arith.constant dense<0.000000e+00> : vector<16x128xf32>
    %70 = tpu.matmul %57, %69, %cst_34 {dimension_numbers = #tpu.dot_dimension_numbers<[1], [0], [0], [1], [0, 0, 1, 1], [], []>} : vector<16x128xbf16>, vector<128x128xbf16>, vector<16x128xf32> -> vector<16x128xf32>
    %c15_i32_35 = arith.constant 15 : i32
    %71 = tpu.dynamic_rotate %70 by %c15_i32_35 dim 0 : vector<16x128xf32>, i32 -> vector<16x128xf32>
    %72 = vector.broadcast %24 : vector<16x1xf32> to vector<16x128xf32>
    %73 = arith.mulf %71, %72 : vector<16x128xf32>
    %74 = arith.addf %67, %73 : vector<16x128xf32>
    %c0_36 = arith.constant 0 : index
    %c0_37 = arith.constant 0 : index
    %75 = vector.load %arg6[%c0_36, %c0_37] : memref<1x128xf32, #tpu.memory_space<vmem>>, vector<1x128xf32>
    %76 = vector.broadcast %75 : vector<1x128xf32> to vector<16x128xf32>
    %77 = arith.mulf %74, %76 : vector<16x128xf32>
    %c0_38 = arith.constant 0 : index
    %c0_39 = arith.constant 0 : index
    %78 = vector.load %arg7[%c0_38, %c0_39] : memref<1x128xf32, #tpu.memory_space<vmem>>, vector<1x128xf32>
    %79 = vector.broadcast %78 : vector<1x128xf32> to vector<16x128xf32>
    %80 = arith.addf %77, %79 : vector<16x128xf32>
    %c0_40 = arith.constant 0 : index
    %c0_41 = arith.constant 0 : index
    %c0_42 = arith.constant 0 : index
    %81 = vector.load %arg1[%c0_40, %c0_41, %c0_42] : memref<1x16x128xf32, #tpu.memory_space<vmem>>, vector<1x16x128xf32>
    %82 = vector.shape_cast %81 : vector<1x16x128xf32> to vector<16x128xf32>
    %83 = arith.addf %80, %82 : vector<16x128xf32>
    %84 = vector.shape_cast %83 : vector<16x128xf32> to vector<1x16x128xf32>
    %c0_43 = arith.constant 0 : index
    %c0_44 = arith.constant 0 : index
    %c0_45 = arith.constant 0 : index
    %85 = vector.load %arg8[%c0_43, %c0_44, %c0_45] : memref<1x16x128xf32, #tpu.memory_space<vmem>>, vector<1x16x128xf32>
    tpu.vector_store %arg8[%c0_43, %c0_44, %c0_45], %84 {strides = array<i32>} : memref<1x16x128xf32, #tpu.memory_space<vmem>>, vector<1x16x128xf32>,
    return
  }
  func.func @transform_0(%arg0: i32) -> (i32, i32, i32) {
    %c0_i32 = arith.constant 0 : i32
    %c0_i32_0 = arith.constant 0 : i32
    %c0_i32_1 = arith.constant 0 : i32
    return %arg0, %c0_i32, %c0_i32_0 : i32, i32, i32
  }
  func.func @transform_1(%arg0: i32) -> (i32, i32, i32) {
    %c0_i32 = arith.constant 0 : i32
    %c0_i32_0 = arith.constant 0 : i32
    %c0_i32_1 = arith.constant 0 : i32
    %c0_i32_2 = arith.constant 0 : i32
    return %c0_i32, %c0_i32_0, %c0_i32_1 : i32, i32, i32
  }
  func.func @transform_2(%arg0: i32) -> (i32, i32) {
    %c0_i32 = arith.constant 0 : i32
    %c0_i32_0 = arith.constant 0 : i32
    %c0_i32_1 = arith.constant 0 : i32
    return %c0_i32, %c0_i32_0 : i32, i32
  }
  func.func @transform_3(%arg0: i32) -> (i32, i32) {
    %c0_i32 = arith.constant 0 : i32
    %c0_i32_0 = arith.constant 0 : i32
    %c0_i32_1 = arith.constant 0 : i32
    return %c0_i32, %c0_i32_0 : i32, i32
  }
  func.func @transform_4(%arg0: i32) -> (i32, i32, i32) {
    %c0_i32 = arith.constant 0 : i32
    %c0_i32_0 = arith.constant 0 : i32
    %c0_i32_1 = arith.constant 0 : i32
    %c0_i32_2 = arith.constant 0 : i32
    return %c0_i32, %c0_i32_0, %c0_i32_1 : i32, i32, i32
  }
  func.func @transform_5(%arg0: i32) -> (i32, i32) {
    %c0_i32 = arith.constant 0 : i32
    %c0_i32_0 = arith.constant 0 : i32
    %c0_i32_1 = arith.constant 0 : i32
    return %c0_i32, %c0_i32_0 : i32, i32
  }
  func.func @transform_6(%arg0: i32) -> (i32, i32) {
    %c0_i32 = arith.constant 0 : i32
    %c0_i32_0 = arith.constant 0 : i32
    %c0_i32_1 = arith.constant 0 : i32
    return %c0_i32, %c0_i32_0 : i32, i32
  }
  func.func @transform_7(%arg0: i32) -> (i32, i32, i32) {
    %c0_i32 = arith.constant 0 : i32
    %c0_i32_0 = arith.constant 0 : i32
    %c0_i32_1 = arith.constant 0 : i32
    return %arg0, %c0_i32, %c0_i32_0 : i32, i32, i32
  }
}

</mosaic_0001>

<llo_original>
// kernel: tile.23
$region0: #{tile.23}
  #allocation0 [shape = 's32[1]{0}', space=sflag, size = 0x4, scoped, tag = 'scoped memory for tile.23']
  %s0 = inlined_call_operand.vmem [shape: f32[8], index: 0, kind: input, shape index: {}]
  %s1 = inlined_call_operand.vmem [shape: f32[16,8], index: 1, kind: output, shape index: {}]
  // Predicated region
  $region2: #{tile.23} parent=0 // pred_check
    _
  $region3: #{tile.23} parent=0 // pred_check_branch
    %3 = sbr.rel (0) target = $region5
  $region4: #{tile.23} parent=0 // pred_region
    _
  $region5: #{tile.23} parent=0 // pred_fallthru
    _
  %v4 = vld [vmem:[%s0] ss:$0 sm:$0xff]
  %5 = vst [vmem:[%s1] sm:$0xff] %v4
  %s6 = scalar_lea.vmem %s1, 8
  %7 = vst [vmem:[%s6] sm:$0xff] %v4

// kernel: tile.24
$region0: #{tile.24}
  %s0 = inlined_call_operand.vmem [shape: f32[16,8], index: 0, kind: input, shape index: {}]
  %s1 = inlined_call_operand.vmem [shape: f32[1,128], index: 1, kind: output, shape index: {}]
  $region1: #{tile.24} parent=0
    #allocation0 [shape = 'u8[4096]{0}', space=vmem, size = 0x1000, scoped, tag = 'scoped mem for output reshape']
    %v2 = vld [vmem:[%s0] sm:$0x1]
    %vm3 = vcmask 64512
    %4 = vst.msk [vmem:[#allocation0] sm:$0x1] %vm3, %v2
    %s5 = scalar_lea.vmem %s0, 15
    %v6 = vld [vmem:[%s5] sm:$0x1]
    %7 = vrot.lane.b32.xlu0 %v6, 120
    %v8 = vpop.permute.xlu0 %7
    %vm9 = vcmask 1048512
    %10 = vst.msk [vmem:[#allocation0] sm:$0x1] %vm9, %v8
    %s11 = scalar_lea.vmem %s0, 14
    %v12 = vld [vmem:[%s11] sm:$0x1]
    %13 = vrot.lane.b32.xlu0 %v12, 112
    %v14 = vpop.permute.xlu0 %13
    %vm15 = vcmask 982912
    %16 = vst.msk [vmem:[#allocation0] sm:$0x1] %vm15, %v14
    %s17 = scalar_lea.vmem %s0, 13
    %v18 = vld [vmem:[%s17] sm:$0x1]
    %19 = vrot.lane.b32.xlu0 %v18, 104
    %v20 = vpop.permute.xlu0 %19
    %vm21 = vcmask 917312
    %22 = vst.msk [vmem:[#allocation0] sm:$0x1] %vm21, %v20
    %s23 = scalar_lea.vmem %s0, 12
    %v24 = vld [vmem:[%s23] sm:$0x1]
    %25 = vrot.lane.b32.xlu0 %v24, 96
    %v26 = vpop.permute.xlu0 %25
    %vm27 = vcmask 851712
    %28 = vst.msk [vmem:[#allocation0] sm:$0x1] %vm27, %v26
    %s29 = scalar_lea.vmem %s0, 11
    %v30 = vld [vmem:[%s29] sm:$0x1]
    %31 = vrot.lane.b32.xlu0 %v30, 88
    %v32 = vpop.permute.xlu0 %31
    %vm33 = vcmask 786112
    %34 = vst.msk [vmem:[#allocation0] sm:$0x1] %vm33, %v32
    %s35 = scalar_lea.vmem %s0, 10
    %v36 = vld [vmem:[%s35] sm:$0x1]
    %37 = vrot.lane.b32.xlu0 %v36, 80
    %v38 = vpop.permute.xlu0 %37
    %vm39 = vcmask 720512
    %40 = vst.msk [vmem:[#allocation0] sm:$0x1] %vm39, %v38
    %s41 = scalar_lea.vmem %s0, 9
    %v42 = vld [vmem:[%s41] sm:$0x1]
    %43 = vrot.lane.b32.xlu0 %v42, 72
    %v44 = vpop.permute.xlu0 %43
    %vm45 = vcmask 654912
    %46 = vst.msk [vmem:[#allocation0] sm:$0x1] %vm45, %v44
    %s47 = scalar_lea.vmem %s0, 8
    %v48 = vld [vmem:[%s47] sm:$0x1]
    %49 = vrot.lane.b32.xlu0 %v48, 64
    %v50 = vpop.permute.xlu0 %49
    %vm51 = vcmask 589312
    %52 = vst.msk [vmem:[#allocation0] sm:$0x1] %vm51, %v50
    %s53 = scalar_lea.vmem %s0, 7
    %v54 = vld [vmem:[%s53] sm:$0x1]
    %55 = vrot.lane.b32.xlu0 %v54, 56
    %v56 = vpop.permute.xlu0 %55
    %vm57 = vcmask 523712
    %58 = vst.msk [vmem:[#allocation0] sm:$0x1] %vm57, %v56
    %s59 = scalar_lea.vmem %s0, 6
    %v60 = vld [vmem:[%s59] sm:$0x1]
    %61 = vrot.lane.b32.xlu0 %v60, 48
    %v62 = vpop.permute.xlu0 %61
    %vm63 = vcmask 458112
    %64 = vst.msk [vmem:[#allocation0] sm:$0x1] %vm63, %v62
    %s65 = scalar_lea.vmem %s0, 5
    %v66 = vld [vmem:[%s65] sm:$0x1]
    %67 = vrot.lane.b32.xlu0 %v66, 40
    %v68 = vpop.permute.xlu0 %67
    %vm69 = vcmask 392512
    %70 = vst.msk [vmem:[#allocation0] sm:$0x1] %vm69, %v68
    %s71 = scalar_lea.vmem %s0, 4
    %v72 = vld [vmem:[%s71] sm:$0x1]
    %73 = vrot.lane.b32.xlu0 %v72, 32
    %v74 = vpop.permute.xlu0 %73
    %vm75 = vcmask 326912
    %76 = vst.msk [vmem:[#allocation0] sm:$0x1] %vm75, %v74
    %s77 = scalar_lea.vmem %s0, 3
    %v78 = vld [vmem:[%s77] sm:$0x1]
    %79 = vrot.lane.b32.xlu0 %v78, 24
    %v80 = vpop.permute.xlu0 %79
    %vm81 = vcmask 261312
    %82 = vst.msk [vmem:[#allocation0] sm:$0x1] %vm81, %v80
    %s83 = scalar_lea.vmem %s0, 2
    %v84 = vld [vmem:[%s83] sm:$0x1]
    %85 = vrot.lane.b32.xlu0 %v84, 16
    %v86 = vpop.permute.xlu0 %85
    %vm87 = vcmask 195712
    %88 = vst.msk [vmem:[#allocation0] sm:$0x1] %vm87, %v86
    %s89 = scalar_lea.vmem %s0, 1
    %v90 = vld [vmem:[%s89] sm:$0x1]
    %91 = vrot.lane.b32.xlu0 %v90, 8
    %v92 = vpop.permute.xlu0 %91
    %vm93 = vcmask 130112
    %94 = vst.msk [vmem:[#allocation0] sm:$0x1] %vm93, %v92
    %s96 = ssub.s32 2, 1
    %v97 = vld [vmem:[#allocation0] sm:%s96]
    %s99 = ssub.s32 2, 1
    %100 = vst [vmem:[%s1] sm:%s99] %v97

// kernel: residual_forward.1
$region0: #{residual_forward.1}
  #allocation0 [shape = 'u32[]', space=smem, size = 0x4, offset = 0x4, fixed_abs, tag = 'smem constant byte address 0x4 - core index']
  #allocation1 [shape = 'u32[72,128]{1,0:T(1,128)}', space=vmem, size = 0x9000, scoped, tag = 'internal scratch']
  %s0 = inlined_call_operand.vmem [shape: f32[2,16,128], index: 0, kind: input, shape index: {}]
  %s1 = inlined_call_operand.vmem [shape: bf16[3,128,128], index: 1, kind: input, shape index: {}]
  %s2 = inlined_call_operand.vmem [shape: f32[1,128], index: 2, kind: input, shape index: {}]
  %s3 = inlined_call_operand.vmem [shape: f32[1,128], index: 3, kind: input, shape index: {}]
  %s4 = inlined_call_operand.vmem [shape: bf16[3,128,128], index: 4, kind: input, shape index: {}]
  %s5 = inlined_call_operand.vmem [shape: f32[1,128], index: 5, kind: input, shape index: {}]
  %s6 = inlined_call_operand.vmem [shape: f32[1,128], index: 6, kind: input, shape index: {}]
  %s7 = inlined_call_operand.vmem [shape: f32[2,16,128], index: 7, kind: output, shape index: {}]
  %s8 = sld [smem:[#allocation0]]
  $region61: #{residual_forward.1} parent=0
    _
  %s10 = ssub.s32 1, %s8
  %s11 = scalar_select 0, %s10, %s8
  loop: start=0, step=1, limit=4
  $region2: #{residual_forward.1} parent=0 // loop_pre_header
    _
  $region3: #{residual_forward.1} parent=0 // loop_header
    %s13 = sphi 0, %s17
    %p14 = scmp.ge.s32.totalorder %s13, 4
    %s23 = sphi 0, %s25
    %s26 = sphi 0, %s23
    %s27 = sphi 0, %s26
    %s43 = sphi 0, %s27
    %s47 = sphi 0, %s47
    %s49 = sphi 0, %s47
    %s50 = sphi 0, %s49
    %s64 = sphi 0, %s50
    %s68 = sphi 0, %s68
    %s70 = sphi 0, %s68
    %s71 = sphi 0, %s70
    %s85 = sphi 0, %s71
    %s89 = sphi 0, %s89
    %s91 = sphi 0, %s89
    %s92 = sphi 0, %s91
    %s106 = sphi 0, %s92
    %s110 = sphi 0, %s110
    %s112 = sphi 0, %s110
    %s113 = sphi 0, %s112
    %s127 = sphi 0, %s113
    %s131 = sphi 0, %s131
    %s133 = sphi 0, %s131
    %s134 = sphi 0, %s133
    %s148 = sphi 0, %s134
    %s152 = sphi 0, %s152
    %s154 = sphi 0, %s152
    %s155 = sphi 0, %s154
    %s169 = sphi 0, %s155
    %s175 = sphi 0, %s177
    %s178 = sphi 0, %s175
    %s179 = sphi 0, %s178
    %s195 = sphi 0, %s179
  $region4: #{residual_forward.1} parent=0 // loop_header_branch
    %16 = sbr.rel (%p14) target = $region8
  $region5: #{residual_forward.1} parent=0 // loop_body
    %s18 = ssub.s32 %s13, 1
    %s19 = ssub.s32 %s13, 2
    %s20 = sadd.s32 %s13, 1
    %s21 = ssub.s32 %s13, %s20
    %p22 = scmp.eq.s32.totalorder %s21, 0
    %s24 = sadd.s32 %s23, 1
    %s25 = scalar_select %p22, %s23, %s24
    %p28 = pneg %p22
    %p29 = scmp.eq.s32.totalorder %s13, 1
    %p30 = por %p28, %p29
    %p31 = scmp.ne.s32.totalorder %s23, %s26
    %p32 = scmp.eq.s32.totalorder %s13, 0
    %p33 = por %p31, %p32
    %p34 = scmp.ne.s32.totalorder %s23, %s26
    %p35 = scmp.eq.s32.totalorder %s18, 1
    %p36 = por %p34, %p35
    %p37 = scmp.ne.s32.totalorder %s26, %s27
    %p38 = scmp.eq.s32.totalorder %s18, 0
    %p39 = por %p37, %p38
    %p40 = scmp.ne.s32.totalorder %s26, %s27
    %p41 = scmp.eq.s32.totalorder %s19, 1
    %p42 = por %p40, %p41
    %p44 = scmp.ne.s32.totalorder %s27, %s43
    %p45 = scmp.eq.s32.totalorder %s19, 0
    %p46 = por %p44, %p45
    %s48 = sadd.s32 %s47, 1
    %p51 = scmp.eq.s32.totalorder %s13, 1
    %p52 = scmp.ne.s32.totalorder %s47, %s49
    %p53 = scmp.eq.s32.totalorder %s13, 0
    %p54 = por %p52, %p53
    %p55 = scmp.ne.s32.totalorder %s47, %s49
    %p56 = scmp.eq.s32.totalorder %s18, 1
    %p57 = por %p55, %p56
    %p58 = scmp.ne.s32.totalorder %s49, %s50
    %p59 = scmp.eq.s32.totalorder %s18, 0
    %p60 = por %p58, %p59
    %p61 = scmp.ne.s32.totalorder %s49, %s50
    %p62 = scmp.eq.s32.totalorder %s19, 1
    %p63 = por %p61, %p62
    %p65 = scmp.ne.s32.totalorder %s50, %s64
    %p66 = scmp.eq.s32.totalorder %s19, 0
    %p67 = por %p65, %p66
    %s69 = sadd.s32 %s68, 1
    %p72 = scmp.eq.s32.totalorder %s13, 1
    %p73 = scmp.ne.s32.totalorder %s68, %s70
    %p74 = scmp.eq.s32.totalorder %s13, 0
    %p75 = por %p73, %p74
    %p76 = scmp.ne.s32.totalorder %s68, %s70
    %p77 = scmp.eq.s32.totalorder %s18, 1
    %p78 = por %p76, %p77
    %p79 = scmp.ne.s32.totalorder %s70, %s71
    %p80 = scmp.eq.s32.totalorder %s18, 0
    %p81 = por %p79, %p80
    %p82 = scmp.ne.s32.totalorder %s70, %s71
    %p83 = scmp.eq.s32.totalorder %s19, 1
    %p84 = por %p82, %p83
    %p86 = scmp.ne.s32.totalorder %s71, %s85
    %p87 = scmp.eq.s32.totalorder %s19, 0
    %p88 = por %p86, %p87
    %s90 = sadd.s32 %s89, 1
    %p93 = scmp.eq.s32.totalorder %s13, 1
    %p94 = scmp.ne.s32.totalorder %s89, %s91
    %p95 = scmp.eq.s32.totalorder %s13, 0
    %p96 = por %p94, %p95
    %p97 = scmp.ne.s32.totalorder %s89, %s91
    %p98 = scmp.eq.s32.totalorder %s18, 1
    %p99 = por %p97, %p98
    %p100 = scmp.ne.s32.totalorder %s91, %s92
    %p101 = scmp.eq.s32.totalorder %s18, 0
    %p102 = por %p100, %p101
    %p103 = scmp.ne.s32.totalorder %s91, %s92
    %p104 = scmp.eq.s32.totalorder %s19, 1
    %p105 = por %p103, %p104
    %p107 = scmp.ne.s32.totalorder %s92, %s106
    %p108 = scmp.eq.s32.totalorder %s19, 0
    %p109 = por %p107, %p108
    %s111 = sadd.s32 %s110, 1
    %p114 = scmp.eq.s32.totalorder %s13, 1
    %p115 = scmp.ne.s32.totalorder %s110, %s112
    %p116 = scmp.eq.s32.totalorder %s13, 0
    %p117 = por %p115, %p116
    %p118 = scmp.ne.s32.totalorder %s110, %s112
    %p119 = scmp.eq.s32.totalorder %s18, 1
    %p120 = por %p118, %p119
    %p121 = scmp.ne.s32.totalorder %s112, %s113
    %p122 = scmp.eq.s32.totalorder %s18, 0
    %p123 = por %p121, %p122
    %p124 = scmp.ne.s32.totalorder %s112, %s113
    %p125 = scmp.eq.s32.totalorder %s19, 1
    %p126 = por %p124, %p125
    %p128 = scmp.ne.s32.totalorder %s113, %s127
    %p129 = scmp.eq.s32.totalorder %s19, 0
    %p130 = por %p128, %p129
    %s132 = sadd.s32 %s131, 1
    %p135 = scmp.eq.s32.totalorder %s13, 1
    %p136 = scmp.ne.s32.totalorder %s131, %s133
    %p137 = scmp.eq.s32.totalorder %s13, 0
    %p138 = por %p136, %p137
    %p139 = scmp.ne.s32.totalorder %s131, %s133
    %p140 = scmp.eq.s32.totalorder %s18, 1
    %p141 = por %p139, %p140
    %p142 = scmp.ne.s32.totalorder %s133, %s134
    %p143 = scmp.eq.s32.totalorder %s18, 0
    %p144 = por %p142, %p143
    %p145 = scmp.ne.s32.totalorder %s133, %s134
    %p146 = scmp.eq.s32.totalorder %s19, 1
    %p147 = por %p145, %p146
    %p149 = scmp.ne.s32.totalorder %s134, %s148
    %p150 = scmp.eq.s32.totalorder %s19, 0
    %p151 = por %p149, %p150
    %s153 = sadd.s32 %s152, 1
    %p156 = scmp.eq.s32.totalorder %s13, 1
    %p157 = scmp.ne.s32.totalorder %s152, %s154
    %p158 = scmp.eq.s32.totalorder %s13, 0
    %p159 = por %p157, %p158
    %p160 = scmp.ne.s32.totalorder %s152, %s154
    %p161 = scmp.eq.s32.totalorder %s18, 1
    %p162 = por %p160, %p161
    %p163 = scmp.ne.s32.totalorder %s154, %s155
    %p164 = scmp.eq.s32.totalorder %s18, 0
    %p165 = por %p163, %p164
    %p166 = scmp.ne.s32.totalorder %s154, %s155
    %p167 = scmp.eq.s32.totalorder %s19, 1
    %p168 = por %p166, %p167
    %p170 = scmp.ne.s32.totalorder %s155, %s169
    %p171 = scmp.eq.s32.totalorder %s19, 0
    %p172 = por %p170, %p171
    %s173 = ssub.s32 %s13, %s20
    %p174 = scmp.eq.s32.totalorder %s173, 0
    %s176 = sadd.s32 %s175, 1
    %s177 = scalar_select %p174, %s175, %s176
    %p180 = pneg %p174
    %p181 = scmp.eq.s32.totalorder %s13, 1
    %p182 = por %p180, %p181
    %p183 = scmp.ne.s32.totalorder %s175, %s178
    %p184 = scmp.eq.s32.totalorder %s13, 0
    %p185 = por %p183, %p184
    %p186 = scmp.ne.s32.totalorder %s175, %s178
    %p187 = scmp.eq.s32.totalorder %s18, 1
    %p188 = por %p186, %p187
    %p189 = scmp.ne.s32.totalorder %s178, %s179
    %p190 = scmp.eq.s32.totalorder %s18, 0
    %p191 = por %p189, %p190
    %p192 = scmp.ne.s32.totalorder %s178, %s179
    %p193 = scmp.eq.s32.totalorder %s19, 1
    %p194 = por %p192, %p193
    %p196 = scmp.ne.s32.totalorder %s179, %s195
    %p197 = scmp.eq.s32.totalorder %s19, 0
    %p198 = por %p196, %p197
    %p199 = scmp.le.s32.totalorder 1, %s13
    %p200 = scmp.lt.s32.totalorder %s13, 3
    %p201 = pnand %p199, %p200
    %p202 = pneg %p201
    // Predicated region
    $region9: #{residual_forward.1} parent=5 // pred_check
      _
    $region10: #{residual_forward.1} parent=5 // pred_check_branch
      %204 = sbr.rel (%p201) target = $region12
    $region11: #{residual_forward.1} parent=5 // pred_region
      %s205 = ssub.s32 %s13, 1
      // Predicated region
      $region13: #{residual_forward.1} parent=11 // pred_check
        %p206 = pneg %p60
      $region14: #{residual_forward.1} parent=11 // pred_check_branch
        %208 = sbr.rel (%p206) target = $region16
      $region15: #{residual_forward.1} parent=11 // pred_region
        _
      $region16: #{residual_forward.1} parent=11 // pred_fallthru
        _
      // Predicated region
      $region17: #{residual_forward.1} parent=11 // pred_check
        %p209 = pneg %p81
      $region18: #{residual_forward.1} parent=11 // pred_check_branch
        %211 = sbr.rel (%p209) target = $region20
      $region19: #{residual_forward.1} parent=11 // pred_region
        _
      $region20: #{residual_forward.1} parent=11 // pred_fallthru
        _
      // Predicated region
      $region21: #{residual_forward.1} parent=11 // pred_check
        %p212 = pneg %p102
      $region22: #{residual_forward.1} parent=11 // pred_check_branch
        %214 = sbr.rel (%p212) target = $region24
      $region23: #{residual_forward.1} parent=11 // pred_region
        _
      $region24: #{residual_forward.1} parent=11 // pred_fallthru
        _
      // Predicated region
      $region25: #{residual_forward.1} parent=11 // pred_check
        %p215 = pneg %p123
      $region26: #{residual_forward.1} parent=11 // pred_check_branch
        %217 = sbr.rel (%p215) target = $region28
      $region27: #{residual_forward.1} parent=11 // pred_region
        _
      $region28: #{residual_forward.1} parent=11 // pred_fallthru
        _
      // Predicated region
      $region29: #{residual_forward.1} parent=11 // pred_check
        %p218 = pneg %p144
      $region30: #{residual_forward.1} parent=11 // pred_check_branch
        %220 = sbr.rel (%p218) target = $region32
      $region31: #{residual_forward.1} parent=11 // pred_region
        _
      $region32: #{residual_forward.1} parent=11 // pred_fallthru
        _
      // Predicated region
      $region33: #{residual_forward.1} parent=11 // pred_check
        %p221 = pneg %p165
      $region34: #{residual_forward.1} parent=11 // pred_check_branch
        %223 = sbr.rel (%p221) target = $region36
      $region35: #{residual_forward.1} parent=11 // pred_region
        _
      $region36: #{residual_forward.1} parent=11 // pred_fallthru
        _
    $region12: #{residual_forward.1} parent=5 // pred_fallthru
      _
    %p224 = scmp.lt.s32.totalorder %s13, 2
    // Predicated region
    $region37: #{residual_forward.1} parent=5 // pred_check
      %p225 = pneg %p224
    $region38: #{residual_forward.1} parent=5 // pred_check_branch
      %227 = sbr.rel (%p225) target = $region40
    $region39: #{residual_forward.1} parent=5 // pred_region
      // Predicated region
      $region41: #{residual_forward.1} parent=39 // pred_check
        %p228 = pneg %p33
      $region42: #{residual_forward.1} parent=39 // pred_check_branch
        %230 = sbr.rel (%p228) target = $region44
      $region43: #{residual_forward.1} parent=39 // pred_region
        %p231 = scmp.lt.s32.totalorder %s13, 1
        %s232 = scalar_select %p231, %s13, 1
        %s233 = smul.addr %s232, 2
        %s234 = smul.addr %s233, 8
        %s235 = scalar_lea.vmem %s0, %s234
      $region44: #{residual_forward.1} parent=39 // pred_fallthru
        _
    $region40: #{residual_forward.1} parent=5 // pred_fallthru
      _
    %p236 = scmp.le.s32.totalorder 1, %s13
    %p237 = scmp.lt.s32.totalorder %s13, 3
    %p238 = pnand %p236, %p237
    %p239 = pneg %p238
    // Predicated region
    $region45: #{residual_forward.1} parent=5 // pred_check
      _
    $region46: #{residual_forward.1} parent=5 // pred_check_branch
      %241 = sbr.rel (%p238) target = $region48
    $region47: #{residual_forward.1} parent=5 // pred_region
      %s242 = ssub.s32 %s13, 1
      %p243 = scmp.lt.s32.totalorder %s18, 1
      %s244 = scalar_select %p243, %s18, 1
      %s245 = smul.addr %s244, 2
      %s246 = smul.addr %s245, 8
      %s247 = scalar_lea.vmem %s0, %s246
      %p248 = pneg %p39
      %p249 = pneg %p36
      %p250 = pneg %p60
      %p251 = pneg %p57
      %p252 = pneg %p81
      %p253 = pneg %p78
      %p254 = pneg %p102
      %p255 = pneg %p99
      %p256 = pneg %p123
      %p257 = pneg %p120
      %p258 = pneg %p144
      %p259 = pneg %p141
      %p260 = pneg %p165
      %p261 = pneg %p162
      %p262 = pneg %p191
      %p263 = pneg %p188
      %p264 = scmp.lt.s32.totalorder %s18, 1
      %s265 = scalar_select %p264, %s18, 1
      %s266 = smul.addr %s265, 2
      %s267 = smul.addr %s266, 8
      %s268 = scalar_lea.vmem %s7, %s267
      %p269 = scmp.lt.s32.totalorder %s18, 1
      %s270 = scalar_select %p269, %s18, 1
      %s271 = smul.addr %s270, 2
      %s272 = smul.addr %s271, 8
      %s273 = scalar_lea.vmem %s0, %s272
      %p274 = scmp.lt.s32.totalorder %s18, 1
      %s275 = scalar_select %p274, %s18, 1
      %s276 = smul.addr %s275, 2
      %s277 = smul.addr %s276, 8
      %s278 = scalar_lea.vmem %s7, %s277
      %v279 = vlaneseq
      %v280 = vshrl.u32 %v279, 7
      %v281 = vadd.s32 %v280, 8
      %vm282 = vcmp.lt.s32.totalorder %v280, 0
      %v283 = vsub.s32 0, %v280
      %v284 = vsel %vm282, %v283, %v280
      %v285 = vshrl.u32 %v284, 4
      %v286 = vand.u32 %v284, 15
      %v287 = vsub.s32 0, %v286
      %v288 = vsel %vm282, %v287, %v286
      %vm289 = vcmp.lt.s32.totalorder %v281, 0
      %v290 = vsub.s32 0, %v281
      %v291 = vsel %vm289, %v290, %v281
      %v292 = vshrl.u32 %v291, 4
      %v293 = vand.u32 %v291, 15
      %v294 = vsub.s32 0, %v293
      %v295 = vsel %vm289, %v294, %v293
      %vm296 = vcmp.ne.s32.totalorder %v288, 0
      %vm297 = vcmp.ne.s32.totalorder %v295, 0
      %vm298 = vcmp.lt.s32.totalorder %v288, 0
      %vm299 = vcmp.lt.s32.totalorder %v295, 0
      %vm300 = vmand %vm298, %vm296
      %vm301 = vmand %vm299, %vm297
      %v302 = vadd.s32 %v288, 16
      %v303 = vadd.s32 %v295, 16
      %v304 = vsel %vm300, %v302, %v288
      %v305 = vsel %vm301, %v303, %v295
      %vm306 = vcmp.ne.s32.totalorder %v304, 0
      %vm307 = vcmp.ne.s32.totalorder %v305, 0
      %v308 = vsel %vm306, 1, 0
      %v309 = vsel %vm307, 1, 0
      %v310 = vcvt.s32.f32 %v308
      %v311 = vcvt.s32.f32 %v309
      %vm312 = vcmp.ne.s32.totalorder %v304, 15
      %vm313 = vcmp.ne.s32.totalorder %v305, 15
      %v314 = vsel %vm312, 1, 0
      %v315 = vsel %vm313, 1, 0
      %v316 = vcvt.s32.f32 %v314
      %v317 = vcvt.s32.f32 %v315
      %v318 = vld [vmem:[%s273] sm:$0xff]
      %v319 = vld [vmem:[%s273 + $0x8] sm:$0xff]
      %v320 = vpack.c.bf16 %v319, %v318
      %v321 = vld [vmem:[%s1] sm:$0xf]
      %v322 = vld [vmem:[%s1 + $0x4] sm:$0xf]
      %v323 = vld [vmem:[%s1 + $0x8] sm:$0xf]
      %v324 = vld [vmem:[%s1 + $0xc] sm:$0xf]
      %v325 = vld [vmem:[%s1 + $0x10] sm:$0xf]
      %v326 = vld [vmem:[%s1 + $0x14] sm:$0xf]
      %v327 = vld [vmem:[%s1 + $0x18] sm:$0xf]
      %v328 = vld [vmem:[%s1 + $0x1c] sm:$0xf]
      %v329 = vld [vmem:[%s1 + $0x20] sm:$0xf]
      %v330 = vld [vmem:[%s1 + $0x24] sm:$0xf]
      %v331 = vld [vmem:[%s1 + $0x28] sm:$0xf]
      %v332 = vld [vmem:[%s1 + $0x2c] sm:$0xf]
      %v333 = vld [vmem:[%s1 + $0x30] sm:$0xf]
      %v334 = vld [vmem:[%s1 + $0x34] sm:$0xf]
      %v335 = vld [vmem:[%s1 + $0x38] sm:$0xf]
      %v336 = vld [vmem:[%s1 + $0x3c] sm:$0xf]
      %v353 = vunpack.c.l.b16 %v321
      %v354 = vunpack.c.l.b16 %v322
      %v355 = vunpack.c.l.b16 %v323
      %v356 = vunpack.c.l.b16 %v324
      %v357 = vunpack.c.l.b16 %v325
      %v358 = vunpack.c.l.b16 %v326
      %v359 = vunpack.c.l.b16 %v327
      %v360 = vunpack.c.l.b16 %v328
      %v361 = vunpack.c.l.b16 %v329
      %v362 = vunpack.c.l.b16 %v330
      %v363 = vunpack.c.l.b16 %v331
      %v364 = vunpack.c.l.b16 %v332
      %v365 = vunpack.c.l.b16 %v333
      %v366 = vunpack.c.l.b16 %v334
      %v367 = vunpack.c.l.b16 %v335
      %v368 = vunpack.c.l.b16 %v336
      %v369 = vpack.c.b16 %v354, %v353
      %v370 = vpack.c.b16 %v356, %v355
      %v371 = vpack.c.b16 %v358, %v357
      %v372 = vpack.c.b16 %v360, %v359
      %v373 = vpack.c.b16 %v362, %v361
      %v374 = vpack.c.b16 %v364, %v363
      %v375 = vpack.c.b16 %v366, %v365
      %v376 = vpack.c.b16 %v368, %v367
      %385 = vmatpush.bf16.msra.mxu0 %v376
      %386 = vmatpush.bf16.msra.mxu0 %v375
      %387 = vmatpush.bf16.msra.mxu0 %v374
      %388 = vmatpush.bf16.msra.mxu0 %v373
      %389 = vmatpush.bf16.msra.mxu0 %v372
      %390 = vmatpush.bf16.msra.mxu0 %v371
      %391 = vmatpush.bf16.msra.mxu0 %v370
      %392 = vmatpush.bf16.msra.mxu0 %v369
      %393 = vmatmul.bf16.gmra.mxu0 %v320
      %v394 = vpop.f32.mrf.mxu0
      %v395 = vadd.f32 0.0, %v394
      %v396 = vpop.f32.mrf.mxu0
      %v397 = vadd.f32 0.0, %v396
      %398 = vdwg.mxu0
      %v399 = vrot.slane %v395, 7
      %v400 = vrot.slane %v397, 7
      %vm401 = vcmp.lt.s32.totalorder %v280, 1
      %v402 = vsel %vm401, %v399, %v400
      %v403 = vsel %vm401, %v400, %v399
      %v404 = vmul.f32 %v403, %v310
      %v405 = vmul.f32 %v402, %v311
      %s406 = scalar_lea.vmem %s1, 64
      %v407 = vld [vmem:[%s406] sm:$0xf]
      %v408 = vld [vmem:[%s406 + $0x4] sm:$0xf]
      %v409 = vld [vmem:[%s406 + $0x8] sm:$0xf]
      %v410 = vld [vmem:[%s406 + $0xc] sm:$0xf]
      %v411 = vld [vmem:[%s406 + $0x10] sm:$0xf]
      %v412 = vld [vmem:[%s406 + $0x14] sm:$0xf]
      %v413 = vld [vmem:[%s406 + $0x18] sm:$0xf]
      %v414 = vld [vmem:[%s406 + $0x1c] sm:$0xf]
      %v415 = vld [vmem:[%s406 + $0x20] sm:$0xf]
      %v416 = vld [vmem:[%s406 + $0x24] sm:$0xf]
      %v417 = vld [vmem:[%s406 + $0x28] sm:$0xf]
      %v418 = vld [vmem:[%s406 + $0x2c] sm:$0xf]
      %v419 = vld [vmem:[%s406 + $0x30] sm:$0xf]
      %v420 = vld [vmem:[%s406 + $0x34] sm:$0xf]
      %v421 = vld [vmem:[%s406 + $0x38] sm:$0xf]
      %v422 = vld [vmem:[%s406 + $0x3c] sm:$0xf]
      %v439 = vunpack.c.l.b16 %v407
      %v440 = vunpack.c.l.b16 %v408
      %v441 = vunpack.c.l.b16 %v409
      %v442 = vunpack.c.l.b16 %v410
      %v443 = vunpack.c.l.b16 %v411
      %v444 = vunpack.c.l.b16 %v412
      %v445 = vunpack.c.l.b16 %v413
      %v446 = vunpack.c.l.b16 %v414
      %v447 = vunpack.c.l.b16 %v415
      %v448 = vunpack.c.l.b16 %v416
      %v449 = vunpack.c.l.b16 %v417
      %v450 = vunpack.c.l.b16 %v418
      %v451 = vunpack.c.l.b16 %v419
      %v452 = vunpack.c.l.b16 %v420
      %v453 = vunpack.c.l.b16 %v421
      %v454 = vunpack.c.l.b16 %v422
      %v455 = vpack.c.b16 %v440, %v439
      %v456 = vpack.c.b16 %v442, %v441
      %v457 = vpack.c.b16 %v444, %v443
      %v458 = vpack.c.b16 %v446, %v445
      %v459 = vpack.c.b16 %v448, %v447
      %v460 = vpack.c.b16 %v450, %v449
      %v461 = vpack.c.b16 %v452, %v451
      %v462 = vpack.c.b16 %v454, %v453
      %471 = vmatpush.bf16.msra.mxu0 %v462
      %472 = vmatpush.bf16.msra.mxu0 %v461
      %473 = vmatpush.bf16.msra.mxu0 %v460
      %474 = vmatpush.bf16.msra.mxu0 %v459
      %475 = vmatpush.bf16.msra.mxu0 %v458
      %476 = vmatpush.bf16.msra.mxu0 %v457
      %477 = vmatpush.bf16.msra.mxu0 %v456
      %478 = vmatpush.bf16.msra.mxu0 %v455
      %479 = vmatmul.bf16.gmra.mxu0 %v320
      %v480 = vpop.f32.mrf.mxu0
      %v481 = vadd.f32 0.0, %v480
      %v482 = vpop.f32.mrf.mxu0
      %v483 = vadd.f32 0.0, %v482
      %484 = vdwg.mxu0
      %v485 = vadd.f32 %v404, %v481
      %v486 = vadd.f32 %v405, %v483
      %s487 = scalar_lea.vmem %s1, 128
      %v488 = vld [vmem:[%s487] sm:$0xf]
      %v489 = vld [vmem:[%s487 + $0x4] sm:$0xf]
      %v490 = vld [vmem:[%s487 + $0x8] sm:$0xf]
      %v491 = vld [vmem:[%s487 + $0xc] sm:$0xf]
      %v492 = vld [vmem:[%s487 + $0x10] sm:$0xf]
      %v493 = vld [vmem:[%s487 + $0x14] sm:$0xf]
      %v494 = vld [vmem:[%s487 + $0x18] sm:$0xf]
      %v495 = vld [vmem:[%s487 + $0x1c] sm:$0xf]
      %v496 = vld [vmem:[%s487 + $0x20] sm:$0xf]
      %v497 = vld [vmem:[%s487 + $0x24] sm:$0xf]
      %v498 = vld [vmem:[%s487 + $0x28] sm:$0xf]
      %v499 = vld [vmem:[%s487 + $0x2c] sm:$0xf]
      %v500 = vld [vmem:[%s487 + $0x30] sm:$0xf]
      %v501 = vld [vmem:[%s487 + $0x34] sm:$0xf]
      %v502 = vld [vmem:[%s487 + $0x38] sm:$0xf]
      %v503 = vld [vmem:[%s487 + $0x3c] sm:$0xf]
      %v520 = vunpack.c.l.b16 %v488
      %v521 = vunpack.c.l.b16 %v489
      %v522 = vunpack.c.l.b16 %v490
      %v523 = vunpack.c.l.b16 %v491
      %v524 = vunpack.c.l.b16 %v492
      %v525 = vunpack.c.l.b16 %v493
      %v526 = vunpack.c.l.b16 %v494
      %v527 = vunpack.c.l.b16 %v495
      %v528 = vunpack.c.l.b16 %v496
      %v529 = vunpack.c.l.b16 %v497
      %v530 = vunpack.c.l.b16 %v498
      %v531 = vunpack.c.l.b16 %v499
      %v532 = vunpack.c.l.b16 %v500
      %v533 = vunpack.c.l.b16 %v501
      %v534 = vunpack.c.l.b16 %v502
      %v535 = vunpack.c.l.b16 %v503
      %v536 = vpack.c.b16 %v521, %v520
      %v537 = vpack.c.b16 %v523, %v522
      %v538 = vpack.c.b16 %v525, %v524
      %v539 = vpack.c.b16 %v527, %v526
      %v540 = vpack.c.b16 %v529, %v528
      %v541 = vpack.c.b16 %v531, %v530
      %v542 = vpack.c.b16 %v533, %v532
      %v543 = vpack.c.b16 %v535, %v534
      %552 = vmatpush.bf16.msra.mxu0 %v543
      %553 = vmatpush.bf16.msra.mxu0 %v542
      %554 = vmatpush.bf16.msra.mxu0 %v541
      %555 = vmatpush.bf16.msra.mxu0 %v540
      %556 = vmatpush.bf16.msra.mxu0 %v539
      %557 = vmatpush.bf16.msra.mxu0 %v538
      %558 = vmatpush.bf16.msra.mxu0 %v537
      %559 = vmatpush.bf16.msra.mxu0 %v536
      %560 = vmatmul.bf16.gmra.mxu0 %v320
      %v561 = vpop.f32.mrf.mxu0
      %v562 = vadd.f32 0.0, %v561
      %v563 = vpop.f32.mrf.mxu0
      %v564 = vadd.f32 0.0, %v563
      %565 = vdwg.mxu0
      %v566 = vrot.slane %v562, 1
      %v567 = vrot.slane %v564, 1
      %vm568 = vcmp.lt.s32.totalorder %v280, 7
      %v569 = vsel %vm568, %v566, %v567
      %v570 = vsel %vm568, %v567, %v566
      %v571 = vmul.f32 %v569, %v316
      %v572 = vmul.f32 %v570, %v317
      %v573 = vadd.f32 %v485, %v571
      %v574 = vadd.f32 %v486, %v572
      %v575 = vld [vmem:[%s2] sm:$0x1]
      %v577 = vperm.slane %v575, 0
      %v579 = vmul.f32 %v573, %v577
      %v580 = vmul.f32 %v574, %v577
      %v581 = vld [vmem:[%s3] sm:$0x1]
      %v583 = vperm.slane %v581, 0
      %v585 = vadd.f32 %v579, %v583
      %v586 = vadd.f32 %v580, %v583
      %v587 = vxor.u32 %v585, 2147483648
      %v588 = vxor.u32 %v586, 2147483648
      %v589 = vmul.f32 %v587, 1.442695
      %v590 = vpow.pop %v589
      %v591 = vmul.f32 %v588, 1.442695
      %v592 = vpow.pop %v591
      %v593 = vadd.f32 %v590, 1.0
      %v594 = vadd.f32 %v592, 1.0
      %v595 = vrcp.pop %v593
      %v596 = vmul.f32 %v593, %v595
      %v597 = vsub.f32 1.0, %v596
      %v598 = vmul.f32 %v595, %v597
      %v599 = vadd.f32 %v595, %v598
      %vm600 = vweird.f32 %v593
      %vm601 = vweird.f32 %v595
      %vm602 = vmor %vm600, %vm601
      %v603 = vsel %vm602, %v595, %v599
      %v604 = vand.u32 2147483647, %v593
      %vm605 = vcmp.eq.f32.partialorder %v604, 8.507059e+37
      %v606 = vand.u32 %v593, 2147483648
      %v607 = vor.u32 1.1754944e-38, %v606
      %v608 = vsel %vm605, %v607, %v603
      %v609 = vmul.f32 1.0, %v608
      %v610 = vrcp.pop %v594
      %v611 = vmul.f32 %v594, %v610
      %v612 = vsub.f32 1.0, %v611
      %v613 = vmul.f32 %v610, %v612
      %v614 = vadd.f32 %v610, %v613
      %vm615 = vweird.f32 %v594
      %vm616 = vweird.f32 %v610
      %vm617 = vmor %vm615, %vm616
      %v618 = vsel %vm617, %v610, %v614
      %v619 = vand.u32 2147483647, %v594
      %vm620 = vcmp.eq.f32.partialorder %v619, 8.507059e+37
      %v621 = vand.u32 %v594, 2147483648
      %v622 = vor.u32 1.1754944e-38, %v621
      %v623 = vsel %vm620, %v622, %v618
      %v624 = vmul.f32 1.0, %v623
      %v625 = vmul.f32 %v585, %v609
      %v626 = vmul.f32 %v586, %v624
      %v627 = vpack.c.bf16 %v626, %v625
      %v628 = vld [vmem:[%s4] sm:$0xf]
      %v629 = vld [vmem:[%s4 + $0x4] sm:$0xf]
      %v630 = vld [vmem:[%s4 + $0x8] sm:$0xf]
      %v631 = vld [vmem:[%s4 + $0xc] sm:$0xf]
      %v632 = vld [vmem:[%s4 + $0x10] sm:$0xf]
      %v633 = vld [vmem:[%s4 + $0x14] sm:$0xf]
      %v634 = vld [vmem:[%s4 + $0x18] sm:$0xf]
      %v635 = vld [vmem:[%s4 + $0x1c] sm:$0xf]
      %v636 = vld [vmem:[%s4 + $0x20] sm:$0xf]
      %v637 = vld [vmem:[%s4 + $0x24] sm:$0xf]
      %v638 = vld [vmem:[%s4 + $0x28] sm:$0xf]
      %v639 = vld [vmem:[%s4 + $0x2c] sm:$0xf]
      %v640 = vld [vmem:[%s4 + $0x30] sm:$0xf]
      %v641 = vld [vmem:[%s4 + $0x34] sm:$0xf]
      %v642 = vld [vmem:[%s4 + $0x38] sm:$0xf]
      %v643 = vld [vmem:[%s4 + $0x3c] sm:$0xf]
      %v660 = vunpack.c.l.b16 %v628
      %v661 = vunpack.c.l.b16 %v629
      %v662 = vunpack.c.l.b16 %v630
      %v663 = vunpack.c.l.b16 %v631
      %v664 = vunpack.c.l.b16 %v632
      %v665 = vunpack.c.l.b16 %v633
      %v666 = vunpack.c.l.b16 %v634
      %v667 = vunpack.c.l.b16 %v635
      %v668 = vunpack.c.l.b16 %v636
      %v669 = vunpack.c.l.b16 %v637
      %v670 = vunpack.c.l.b16 %v638
      %v671 = vunpack.c.l.b16 %v639
      %v672 = vunpack.c.l.b16 %v640
      %v673 = vunpack.c.l.b16 %v641
      %v674 = vunpack.c.l.b16 %v642
      %v675 = vunpack.c.l.b16 %v643
      %v676 = vpack.c.b16 %v661, %v660
      %v677 = vpack.c.b16 %v663, %v662
      %v678 = vpack.c.b16 %v665, %v664
      %v679 = vpack.c.b16 %v667, %v666
      %v680 = vpack.c.b16 %v669, %v668
      %v681 = vpack.c.b16 %v671, %v670
      %v682 = vpack.c.b16 %v673, %v672
      %v683 = vpack.c.b16 %v675, %v674
      %692 = vmatpush.bf16.msra.mxu0 %v683
      %693 = vmatpush.bf16.msra.mxu0 %v682
      %694 = vmatpush.bf16.msra.mxu0 %v681
      %695 = vmatpush.bf16.msra.mxu0 %v680
      %696 = vmatpush.bf16.msra.mxu0 %v679
      %697 = vmatpush.bf16.msra.mxu0 %v678
      %698 = vmatpush.bf16.msra.mxu0 %v677
      %699 = vmatpush.bf16.msra.mxu0 %v676
      %700 = vmatmul.bf16.gmra.mxu0 %v627
      %v701 = vpop.f32.mrf.mxu0
      %v702 = vadd.f32 0.0, %v701
      %v703 = vpop.f32.mrf.mxu0
      %v704 = vadd.f32 0.0, %v703
      %705 = vdwg.mxu0
      %v706 = vrot.slane %v702, 7
      %v707 = vrot.slane %v704, 7
      %v708 = vsel %vm401, %v706, %v707
      %v709 = vsel %vm401, %v707, %v706
      %v710 = vmul.f32 %v709, %v310
      %v711 = vmul.f32 %v708, %v311
      %s712 = scalar_lea.vmem %s4, 64
      %v713 = vld [vmem:[%s712] sm:$0xf]
      %v714 = vld [vmem:[%s712 + $0x4] sm:$0xf]
      %v715 = vld [vmem:[%s712 + $0x8] sm:$0xf]
      %v716 = vld [vmem:[%s712 + $0xc] sm:$0xf]
      %v717 = vld [vmem:[%s712 + $0x10] sm:$0xf]
      %v718 = vld [vmem:[%s712 + $0x14] sm:$0xf]
      %v719 = vld [vmem:[%s712 + $0x18] sm:$0xf]
      %v720 = vld [vmem:[%s712 + $0x1c] sm:$0xf]
      %v721 = vld [vmem:[%s712 + $0x20] sm:$0xf]
      %v722 = vld [vmem:[%s712 + $0x24] sm:$0xf]
      %v723 = vld [vmem:[%s712 + $0x28] sm:$0xf]
      %v724 = vld [vmem:[%s712 + $0x2c] sm:$0xf]
      %v725 = vld [vmem:[%s712 + $0x30] sm:$0xf]
      %v726 = vld [vmem:[%s712 + $0x34] sm:$0xf]
      %v727 = vld [vmem:[%s712 + $0x38] sm:$0xf]
      %v728 = vld [vmem:[%s712 + $0x3c] sm:$0xf]
      %v745 = vunpack.c.l.b16 %v713
      %v746 = vunpack.c.l.b16 %v714
      %v747 = vunpack.c.l.b16 %v715
      %v748 = vunpack.c.l.b16 %v716
      %v749 = vunpack.c.l.b16 %v717
      %v750 = vunpack.c.l.b16 %v718
      %v751 = vunpack.c.l.b16 %v719
      %v752 = vunpack.c.l.b16 %v720
      %v753 = vunpack.c.l.b16 %v721
      %v754 = vunpack.c.l.b16 %v722
      %v755 = vunpack.c.l.b16 %v723
      %v756 = vunpack.c.l.b16 %v724
      %v757 = vunpack.c.l.b16 %v725
      %v758 = vunpack.c.l.b16 %v726
      %v759 = vunpack.c.l.b16 %v727
      %v760 = vunpack.c.l.b16 %v728
      %v761 = vpack.c.b16 %v746, %v745
      %v762 = vpack.c.b16 %v748, %v747
      %v763 = vpack.c.b16 %v750, %v749
      %v764 = vpack.c.b16 %v752, %v751
      %v765 = vpack.c.b16 %v754, %v753
      %v766 = vpack.c.b16 %v756, %v755
      %v767 = vpack.c.b16 %v758, %v757
      %v768 = vpack.c.b16 %v760, %v759
      %777 = vmatpush.bf16.msra.mxu0 %v768
      %778 = vmatpush.bf16.msra.mxu0 %v767
      %779 = vmatpush.bf16.msra.mxu0 %v766
      %780 = vmatpush.bf16.msra.mxu0 %v765
      %781 = vmatpush.bf16.msra.mxu0 %v764
      %782 = vmatpush.bf16.msra.mxu0 %v763
      %783 = vmatpush.bf16.msra.mxu0 %v762
      %784 = vmatpush.bf16.msra.mxu0 %v761
      %785 = vmatmul.bf16.gmra.mxu0 %v627
      %v786 = vpop.f32.mrf.mxu0
      %v787 = vadd.f32 0.0, %v786
      %v788 = vpop.f32.mrf.mxu0
      %v789 = vadd.f32 0.0, %v788
      %790 = vdwg.mxu0
      %v791 = vadd.f32 %v710, %v787
      %v792 = vadd.f32 %v711, %v789
      %s793 = scalar_lea.vmem %s4, 128
      %v794 = vld [vmem:[%s793] sm:$0xf]
      %v795 = vld [vmem:[%s793 + $0x4] sm:$0xf]
      %v796 = vld [vmem:[%s793 + $0x8] sm:$0xf]
      %v797 = vld [vmem:[%s793 + $0xc] sm:$0xf]
      %v798 = vld [vmem:[%s793 + $0x10] sm:$0xf]
      %v799 = vld [vmem:[%s793 + $0x14] sm:$0xf]
      %v800 = vld [vmem:[%s793 + $0x18] sm:$0xf]
      %v801 = vld [vmem:[%s793 + $0x1c] sm:$0xf]
      %v802 = vld [vmem:[%s793 + $0x20] sm:$0xf]
      %v803 = vld [vmem:[%s793 + $0x24] sm:$0xf]
      %v804 = vld [vmem:[%s793 + $0x28] sm:$0xf]
      %v805 = vld [vmem:[%s793 + $0x2c] sm:$0xf]
      %v806 = vld [vmem:[%s793 + $0x30] sm:$0xf]
      %v807 = vld [vmem:[%s793 + $0x34] sm:$0xf]
      %v808 = vld [vmem:[%s793 + $0x38] sm:$0xf]
      %v809 = vld [vmem:[%s793 + $0x3c] sm:$0xf]
      %v826 = vunpack.c.l.b16 %v794
      %v827 = vunpack.c.l.b16 %v795
      %v828 = vunpack.c.l.b16 %v796
      %v829 = vunpack.c.l.b16 %v797
      %v830 = vunpack.c.l.b16 %v798
      %v831 = vunpack.c.l.b16 %v799
      %v832 = vunpack.c.l.b16 %v800
      %v833 = vunpack.c.l.b16 %v801
      %v834 = vunpack.c.l.b16 %v802
      %v835 = vunpack.c.l.b16 %v803
      %v836 = vunpack.c.l.b16 %v804
      %v837 = vunpack.c.l.b16 %v805
      %v838 = vunpack.c.l.b16 %v806
      %v839 = vunpack.c.l.b16 %v807
      %v840 = vunpack.c.l.b16 %v808
      %v841 = vunpack.c.l.b16 %v809
      %v842 = vpack.c.b16 %v827, %v826
      %v843 = vpack.c.b16 %v829, %v828
      %v844 = vpack.c.b16 %v831, %v830
      %v845 = vpack.c.b16 %v833, %v832
      %v846 = vpack.c.b16 %v835, %v834
      %v847 = vpack.c.b16 %v837, %v836
      %v848 = vpack.c.b16 %v839, %v838
      %v849 = vpack.c.b16 %v841, %v840
      %858 = vmatpush.bf16.msra.mxu0 %v849
      %859 = vmatpush.bf16.msra.mxu0 %v848
      %860 = vmatpush.bf16.msra.mxu0 %v847
      %861 = vmatpush.bf16.msra.mxu0 %v846
      %862 = vmatpush.bf16.msra.mxu0 %v845
      %863 = vmatpush.bf16.msra.mxu0 %v844
      %864 = vmatpush.bf16.msra.mxu0 %v843
      %865 = vmatpush.bf16.msra.mxu0 %v842
      %866 = vmatmul.bf16.gmra.mxu0 %v627
      %v867 = vpop.f32.mrf.mxu0
      %v868 = vadd.f32 0.0, %v867
      %v869 = vpop.f32.mrf.mxu0
      %v870 = vadd.f32 0.0, %v869
      %871 = vdwg.mxu0
      %v872 = vrot.slane %v868, 1
      %v873 = vrot.slane %v870, 1
      %v874 = vsel %vm568, %v872, %v873
      %v875 = vsel %vm568, %v873, %v872
      %v876 = vmul.f32 %v874, %v316
      %v877 = vmul.f32 %v875, %v317
      %v878 = vadd.f32 %v791, %v876
      %v879 = vadd.f32 %v792, %v877
      %v880 = vld [vmem:[%s5] sm:$0x1]
      %v882 = vperm.slane %v880, 0
      %v884 = vmul.f32 %v878, %v882
      %v885 = vmul.f32 %v879, %v882
      %v886 = vld [vmem:[%s6] sm:$0x1]
      %v888 = vperm.slane %v886, 0
      %v890 = vadd.f32 %v884, %v888
      %v891 = vadd.f32 %v885, %v888
      %v892 = vadd.f32 %v890, %v318
      %v893 = vadd.f32 %v891, %v319
      %894 = vst [vmem:[%s278] sm:$0xff] %v892
      %895 = vst [vmem:[%s278 + $0x8] sm:$0xff] %v893
      %p896 = scmp.lt.s32.totalorder %s18, 1
      %s897 = scalar_select %p896, %s18, 1
      %s898 = smul.addr %s897, 2
      %s899 = smul.addr %s898, 8
      %s900 = scalar_lea.vmem %s7, %s899
      // Predicated region
      $region49: #{residual_forward.1} parent=47 // pred_check
        %p901 = pneg %p188
      $region50: #{residual_forward.1} parent=47 // pred_check_branch
        %903 = sbr.rel (%p901) target = $region52
      $region51: #{residual_forward.1} parent=47 // pred_region
        _
      $region52: #{residual_forward.1} parent=47 // pred_fallthru
        _
    $region48: #{residual_forward.1} parent=5 // pred_fallthru
      _
    %p904 = scmp.le.s32.totalorder 2, %s13
    // Predicated region
    $region53: #{residual_forward.1} parent=5 // pred_check
      %p905 = pneg %p904
    $region54: #{residual_forward.1} parent=5 // pred_check_branch
      %907 = sbr.rel (%p905) target = $region56
    $region55: #{residual_forward.1} parent=5 // pred_region
      %s908 = ssub.s32 %s13, 2
      // Predicated region
      $region57: #{residual_forward.1} parent=55 // pred_check
        %p909 = pneg %p194
      $region58: #{residual_forward.1} parent=55 // pred_check_branch
        %911 = sbr.rel (%p909) target = $region60
      $region59: #{residual_forward.1} parent=55 // pred_region
        %p912 = scmp.lt.s32.totalorder %s19, 1
        %s913 = scalar_select %p912, %s19, 1
        %s914 = smul.addr %s913, 2
        %s915 = smul.addr %s914, 8
        %s916 = scalar_lea.vmem %s7, %s915
      $region60: #{residual_forward.1} parent=55 // pred_fallthru
        _
    $region56: #{residual_forward.1} parent=5 // pred_fallthru
      _
  $region6: #{residual_forward.1} parent=0 // loop_footer
    %s17 = sadd.s32 1, %s13
  $region7: #{residual_forward.1} parent=0 // loop_footer_branch
    %12 = sbr.rel target = $region3
  $region8: #{residual_forward.1} parent=0 // loop_exit
    _

</llo_original>
